<compile_context>
chip_gen: v6e
topology: v6e:2x2x1
jax: 0.10.0
libtpu: 0.0.40
codegen_flags: <defaults>
</compile_context>

<pallas_src>
import numpy as np
import jax
import jax.numpy as jnp
from jax import lax
from jax.experimental import pallas as pl
from jax.experimental.pallas import tpu as pltpu

SEQ = 8
HIDDEN = 32
NUM_HEADS = 4
HEAD_DIM = 8
NUM_KV_HEADS = 2
GROUP = NUM_HEADS // NUM_KV_HEADS
FFN = 64
ROT = HEAD_DIM // 2              # ChatGLM: rotary applied to first half of head_dim
THETA = 10000.0
EPS = 1e-5
SCALE = 1.0 / (HEAD_DIM ** 0.5)
Q_SIZE = NUM_HEADS * HEAD_DIM            # 32
KV_SIZE = NUM_KV_HEADS * HEAD_DIM        # 16
QK_SIZE = Q_SIZE + KV_SIZE               # 48
QKV_OUT = Q_SIZE + 2 * KV_SIZE           # 64
EXT_OUT = QKV_OUT + QK_SIZE              # 112 (qkv + swapped-q + swapped-k columns)


def _fs(shape):
    """Full-array BlockSpec for a grid=(1,) pallas_call (block == whole array)."""
    n = len(shape)
    return pl.BlockSpec(shape, lambda i, _n=n: (0,) * _n)


# ------------------------------ fused kernel --------------------------------

def glm_block_kernel(x_ref, ln1_ref, wqkv_ref, bqkv_ref, cos_ref, sin_ref,
                     wdense_ref, ln2_ref, w1_ref, w2_ref, o_ref):
    f32 = jnp.float32
    x = x_ref[...].astype(f32)

    # ---- input RMSNorm
    var = jnp.mean(x * x, axis=-1, keepdims=True)
    ln1 = x * lax.rsqrt(var + EPS) * ln1_ref[...]

    # ---- fused QKV projection (+ extra pair-swapped q/k columns); q already scaled
    qkv = jnp.dot(ln1, wqkv_ref[...], preferred_element_type=f32) + bqkv_ref[...]

    # ---- RoPE: pure elementwise (pair-swap folded into extra weight columns)
    roped = qkv[:, :QK_SIZE] * cos_ref[...] + qkv[:, QKV_OUT:EXT_OUT] * sin_ref[...]
    q = roped[:, :Q_SIZE]                     # [S, NH*HD]  (pre-scaled by 1/sqrt(d))
    k = roped[:, Q_SIZE:QK_SIZE]              # [S, NKV*HD]
    v = qkv[:, QK_SIZE:QKV_OUT]               # [S, NKV*HD]

    # ---- causal GQA attention; GROUP q-heads of a KV group stacked on sublanes
    r = lax.broadcasted_iota(jnp.int32, (SEQ, SEQ), 0)
    c = lax.broadcasted_iota(jnp.int32, (SEQ, SEQ), 1)
    neg = jnp.where(c <= r, f32(0.0), f32(-1e30))                 # additive causal bias
    bias = jnp.concatenate([neg] * GROUP, axis=0)                 # [GROUP*S, S]

    head_outs = []
    for g in range(NUM_KV_HEADS):
        k_g = k[:, g * HEAD_DIM:(g + 1) * HEAD_DIM]               # [S, HD]
        v_g = v[:, g * HEAD_DIM:(g + 1) * HEAD_DIM]               # [S, HD]
        q_st = jnp.concatenate(
            [q[:, h * HEAD_DIM:(h + 1) * HEAD_DIM]
             for h in range(g * GROUP, (g + 1) * GROUP)], axis=0)  # [GROUP*S, HD]
        scores = lax.dot_general(q_st, k_g, (((1,), (1,)), ((), ())),
                                 preferred_element_type=f32)       # [GROUP*S, S]
        scores = scores + bias
        scores = scores - jnp.max(scores, axis=-1, keepdims=True)
        p = jnp.exp(scores)
        p = p * pl.reciprocal(jnp.sum(p, axis=-1, keepdims=True), approx=True)
        pv = jnp.dot(p, v_g, preferred_element_type=f32)           # [GROUP*S, HD]
        for i in range(GROUP):
            head_outs.append(pv[i * SEQ:(i + 1) * SEQ, :])
    attn = jnp.concatenate(head_outs, axis=1)                      # [S, NH*HD] lane-dense

    # ---- output dense + residual (apply_residual_connection_post_layernorm=False)
    h1 = jnp.dot(attn, wdense_ref[...], preferred_element_type=f32) + x

    # ---- post-attention RMSNorm
    var2 = jnp.mean(h1 * h1, axis=-1, keepdims=True)
    ln2 = h1 * lax.rsqrt(var2 + EPS) * ln2_ref[...]

    # ---- gated MLP (SiluAndMul) + residual
    gu = jnp.dot(ln2, w1_ref[...], preferred_element_type=f32)     # [S, 2*FFN]
    gate = gu[:, :FFN]
    up = gu[:, FFN:]
    inter = gate * lax.logistic(gate) * up
    out = jnp.dot(inter, w2_ref[...], preferred_element_type=f32) + h1
    o_ref[...] = out.astype(o_ref.dtype)


# ------------------------------ wrappers -------------------------------------

def glm_block(hidden_states, positions, prep):
    cosf, sinf = rope_tables(positions)
    rope_cos = jnp.tile(cosf, (1, NUM_HEADS + NUM_KV_HEADS))       # [S, QK_SIZE]
    rope_sin = jnp.tile(sinf, (1, NUM_HEADS + NUM_KV_HEADS))       # [S, QK_SIZE]
    args = (hidden_states, prep["ln1_w"], prep["wqkv_ext"], prep["bqkv_ext"],
            rope_cos, rope_sin, prep["wdense_t"], prep["ln2_w"],
            prep["w1_t"], prep["w2_t"])
    return pl.pallas_call(
        glm_block_kernel,
        out_shape=jax.ShapeDtypeStruct(hidden_states.shape, hidden_states.dtype),
        grid=(1,),
        in_specs=[_fs(a.shape) for a in args],
        out_specs=_fs(hidden_states.shape),
        compiler_params=pltpu.CompilerParams(dimension_semantics=("arbitrary",)),
    )(*args)


# ------------------------------ one-time prep --------------------------------

def rope_tables(positions):
    """Interleaved-RoPE cos/sin tables expanded to head_dim (sign folded into sin)."""
    half = ROT // 2
    inv_freq = 1.0 / (THETA ** (jnp.arange(0, ROT, 2, dtype=jnp.float32) / ROT))  # [half]
    freqs = positions.astype(jnp.float32)[:, None] * inv_freq[None, :]            # [S, half]
    cos = jnp.repeat(jnp.cos(freqs), 2, axis=-1)                                  # [S, ROT]
    sin = jnp.repeat(jnp.sin(freqs), 2, axis=-1)
    sign = jnp.tile(jnp.array([-1.0, 1.0], jnp.float32), half)                    # -s,+s,...
    s = positions.shape[0]
    cosf = jnp.concatenate([cos, jnp.ones((s, HEAD_DIM - ROT), jnp.float32)], -1)
    sinf = jnp.concatenate([sin * sign[None, :],
                            jnp.zeros((s, HEAD_DIM - ROT), jnp.float32)], -1)
    return cosf, sinf


def _pair_swap_matrix(n_heads):
    """Block-diagonal matrix that swaps adjacent (even, odd) rotary dims per head."""
    pm = np.zeros((HEAD_DIM, HEAD_DIM), np.float32)
    for j in range(ROT):
        pm[j ^ 1, j] = 1.0          # swap adjacent pairs in the rotary part
    for j in range(ROT, HEAD_DIM):
        pm[j, j] = 1.0              # identity on the non-rotary part
    return np.kron(np.eye(n_heads, dtype=np.float32), pm)


def prepare_params(params):
    """One-time weight prep: transpose to [in, out], fold attention scale into Q,
    and append pair-swapped q/k columns so in-kernel RoPE is elementwise only."""
    wqkv_t = jnp.asarray(params["wqkv"]).T            # [HIDDEN, QKV_OUT], cols = q,k,v
    bqkv = jnp.asarray(params["bqkv"])
    pq = jnp.asarray(_pair_swap_matrix(NUM_HEADS))    # [Q_SIZE, Q_SIZE]
    pk = jnp.asarray(_pair_swap_matrix(NUM_KV_HEADS))  # [KV_SIZE, KV_SIZE]

    q_cols = wqkv_t[:, :Q_SIZE] * SCALE
    k_cols = wqkv_t[:, Q_SIZE:QK_SIZE]
    v_cols = wqkv_t[:, QK_SIZE:QKV_OUT]
    bq = bqkv[:Q_SIZE] * SCALE
    bk = bqkv[Q_SIZE:QK_SIZE]
    bv = bqkv[QK_SIZE:QKV_OUT]

    wqkv_ext = jnp.concatenate([q_cols, k_cols, v_cols, q_cols @ pq, k_cols @ pk], axis=1)
    bqkv_ext = jnp.concatenate([bq, bk, bv, bq @ pq, bk @ pk]).reshape(1, EXT_OUT)

    return {
        "ln1_w": jnp.asarray(params["ln1_w"]),
        "ln2_w": jnp.asarray(params["ln2_w"]),
        "wqkv_ext": wqkv_ext,                                  # [HIDDEN, EXT_OUT]
        "bqkv_ext": bqkv_ext,                                  # [1, EXT_OUT]
        "wdense_t": jnp.asarray(params["wdense"]).T,           # [Q_SIZE, HIDDEN]
        "w1_t": jnp.asarray(params["w1"]).T,                   # [HIDDEN, 2*FFN]
        "w2_t": jnp.asarray(params["w2"]).T,                   # [FFN, HIDDEN]
    }


def init_params(key):
    ks = jax.random.split(key, 7)
    std = 0.02
    return {
        "ln1_w": 1.0 + 0.1 * jax.random.normal(ks[0], (1, HIDDEN), jnp.float32),
        "ln2_w": 1.0 + 0.1 * jax.random.normal(ks[1], (1, HIDDEN), jnp.float32),
        "wqkv": std * jax.random.normal(ks[2], (QKV_OUT, HIDDEN), jnp.float32),
        "bqkv": std * jax.random.normal(ks[3], (QKV_OUT,), jnp.float32),
        "wdense": std * jax.random.normal(ks[4], (HIDDEN, NUM_HEADS * HEAD_DIM), jnp.float32),
        "w1": std * jax.random.normal(ks[5], (2 * FFN, HIDDEN), jnp.float32),
        "w2": std * jax.random.normal(ks[6], (HIDDEN, FFN), jnp.float32),
    }


# ------------------------- pure-JAX reference --------------------------------

def glm_block_ref(hidden_states, positions, params):
    cosf, sinf = rope_tables(positions)
    swap = jnp.asarray(_pair_swap_matrix(1))

    def rms(x, w):
        var = jnp.mean(x * x, axis=-1, keepdims=True)
        return x * lax.rsqrt(var + EPS) * w

    ln1 = rms(hidden_states, params["ln1_w"])
    qkv = ln1 @ params["wqkv"].T + params["bqkv"][None, :]
    q = qkv[:, :Q_SIZE].reshape(SEQ, NUM_HEADS, HEAD_DIM)
    k = qkv[:, Q_SIZE:QK_SIZE].reshape(SEQ, NUM_KV_HEADS, HEAD_DIM)
    v = qkv[:, QK_SIZE:].reshape(SEQ, NUM_KV_HEADS, HEAD_DIM)

    def rope(x):
        swapped = jnp.einsum("snd,de->sne", x, swap)
        return x * cosf[:, None, :] + swapped * sinf[:, None, :]

    q, k = rope(q), rope(k)
    kr = jnp.repeat(k, GROUP, axis=1)
    vr = jnp.repeat(v, GROUP, axis=1)
    scores = jnp.einsum("qhd,khd->hqk", q, kr) * SCALE
    mask = jnp.tril(jnp.ones((SEQ, SEQ), bool))
    scores = jnp.where(mask[None], scores, -1e30)
    p = jax.nn.softmax(scores, axis=-1)
    attn = jnp.einsum("hqk,khd->qhd", p, vr).reshape(SEQ, NUM_HEADS * HEAD_DIM)
    attn_plus_res = attn @ params["wdense"].T + hidden_states
    ln2 = rms(attn_plus_res, params["ln2_w"])
    gu = ln2 @ params["w1"].T
    inter = jax.nn.silu(gu[:, :FFN]) * gu[:, FFN:]
    return inter @ params["w2"].T + attn_plus_res


if __name__ == "__main__":
    key = jax.random.PRNGKey(0)
    kx, kp = jax.random.split(key)
    hidden_states = jax.random.normal(kx, (SEQ, HIDDEN), jnp.float32)
    positions = jnp.arange(SEQ, dtype=jnp.int32)   # InputData.positions (prefill)
    params = init_params(kp)
    prep = prepare_params(params)                  # one-time weight preparation

    fwd = jax.jit(glm_block)
    out = jax.block_until_ready(fwd(hidden_states, positions, prep))
    ref = jax.block_until_ready(glm_block_ref(hidden_states, positions, params))

    assert out.shape == (SEQ, HIDDEN) and out.dtype == jnp.float32
    np.testing.assert_allclose(np.asarray(out), np.asarray(ref), atol=5e-3, rtol=5e-2)
    print("KERNEL_OK")
</pallas_src>

<mosaic_0001>
module attributes {stable_mosaic.version = 11 : i64} {
  func.func @glm_block_kernel(%arg0: i32, %arg1: memref<8x32xf32, #tpu.memory_space<vmem>>, %arg2: memref<1x32xf32, #tpu.memory_space<vmem>>, %arg3: memref<32x112xf32, #tpu.memory_space<vmem>>, %arg4: memref<1x112xf32, #tpu.memory_space<vmem>>, %arg5: memref<8x48xf32, #tpu.memory_space<vmem>>, %arg6: memref<8x48xf32, #tpu.memory_space<vmem>>, %arg7: memref<32x32xf32, #tpu.memory_space<vmem>>, %arg8: memref<1x32xf32, #tpu.memory_space<vmem>>, %arg9: memref<32x128xf32, #tpu.memory_space<vmem>>, %arg10: memref<64x32xf32, #tpu.memory_space<vmem>>, %arg11: memref<8x32xf32, #tpu.memory_space<vmem>>) attributes {dimension_semantics = [#tpu.dimension_semantics<arbitrary>], iteration_bounds = array<i64: 1>, scalar_prefetch = 0 : i64, scratch_operands = 0 : i64, tpu.core_type = #tpu.core_type<tc>, window_params = [{pipeline_mode = #tpu.pipeline_mode<synchronous>, transform_indices = @transform_0, window_bounds = array<i64: 8, 32>}, {pipeline_mode = #tpu.pipeline_mode<synchronous>, transform_indices = @transform_1, window_bounds = array<i64: 1, 32>}, {pipeline_mode = #tpu.pipeline_mode<synchronous>, transform_indices = @transform_2, window_bounds = array<i64: 32, 112>}, {pipeline_mode = #tpu.pipeline_mode<synchronous>, transform_indices = @transform_3, window_bounds = array<i64: 1, 112>}, {pipeline_mode = #tpu.pipeline_mode<synchronous>, transform_indices = @transform_4, window_bounds = array<i64: 8, 48>}, {pipeline_mode = #tpu.pipeline_mode<synchronous>, transform_indices = @transform_5, window_bounds = array<i64: 8, 48>}, {pipeline_mode = #tpu.pipeline_mode<synchronous>, transform_indices = @transform_6, window_bounds = array<i64: 32, 32>}, {pipeline_mode = #tpu.pipeline_mode<synchronous>, transform_indices = @transform_7, window_bounds = array<i64: 1, 32>}, {pipeline_mode = #tpu.pipeline_mode<synchronous>, transform_indices = @transform_8, window_bounds = array<i64: 32, 128>}, {pipeline_mode = #tpu.pipeline_mode<synchronous>, transform_indices = @transform_9, window_bounds = array<i64: 64, 32>}, {pipeline_mode = #tpu.pipeline_mode<synchronous>, transform_indices = @transform_10, window_bounds = array<i64: 8, 32>}]} {
    %c0 = arith.constant 0 : index
    %c0_0 = arith.constant 0 : index
    %0 = vector.load %arg1[%c0, %c0_0] : memref<8x32xf32, #tpu.memory_space<vmem>>, vector<8x32xf32>
    %1 = arith.mulf %0, %0 : vector<8x32xf32>
    %cst = arith.constant dense<0.000000e+00> : vector<8xf32>
    %2 = vector.multi_reduction <add>, %1, %cst [1] : vector<8x32xf32> to vector<8xf32>
    %3 = vector.shape_cast %2 : vector<8xf32> to vector<8x1xf32>
    %cst_1 = arith.constant 3.200000e+01 : f32
    %4 = vector.broadcast %cst_1 : f32 to vector<8x1xf32>
    %5 = arith.divf %3, %4 : vector<8x1xf32>
    %cst_2 = arith.constant 9.99999974E-6 : f32
    %6 = vector.broadcast %cst_2 : f32 to vector<8x1xf32>
    %7 = arith.addf %5, %6 : vector<8x1xf32>
    %8 = math.rsqrt %7 : vector<8x1xf32>
    %9 = vector.broadcast %8 : vector<8x1xf32> to vector<8x32xf32>
    %10 = arith.mulf %0, %9 : vector<8x32xf32>
    %c0_3 = arith.constant 0 : index
    %c0_4 = arith.constant 0 : index
    %11 = vector.load %arg2[%c0_3, %c0_4] : memref<1x32xf32, #tpu.memory_space<vmem>>, vector<1x32xf32>
    %12 = vector.broadcast %11 : vector<1x32xf32> to vector<8x32xf32>
    %13 = arith.mulf %10, %12 : vector<8x32xf32>
    %c0_5 = arith.constant 0 : index
    %c0_6 = arith.constant 0 : index
    %14 = vector.load %arg3[%c0_5, %c0_6] : memref<32x112xf32, #tpu.memory_space<vmem>>, vector<32x112xf32>
    %cst_7 = arith.constant dense<0.000000e+00> : vector<8x112xf32>
    %15 = tpu.matmul %13, %14, %cst_7 {dimension_numbers = #tpu.dot_dimension_numbers<[1], [0], [0], [1], [0, 0, 1, 1], [], []>} : vector<8x32xf32>, vector<32x112xf32>, vector<8x112xf32> -> vector<8x112xf32>
    %c0_8 = arith.constant 0 : index
    %c0_9 = arith.constant 0 : index
    %16 = vector.load %arg4[%c0_8, %c0_9] : memref<1x112xf32, #tpu.memory_space<vmem>>, vector<1x112xf32>
    %17 = vector.broadcast %16 : vector<1x112xf32> to vector<8x112xf32>
    %18 = arith.addf %15, %17 : vector<8x112xf32>
    %19 = vector.extract_strided_slice %18 {offsets = [0, 0], sizes = [8, 48], strides = [1, 1]} : vector<8x112xf32> to vector<8x48xf32>
    %c0_10 = arith.constant 0 : index
    %c0_11 = arith.constant 0 : index
    %20 = vector.load %arg5[%c0_10, %c0_11] : memref<8x48xf32, #tpu.memory_space<vmem>>, vector<8x48xf32>
    %21 = arith.mulf %19, %20 : vector<8x48xf32>
    %22 = vector.extract_strided_slice %18 {offsets = [0, 64], sizes = [8, 48], strides = [1, 1]} : vector<8x112xf32> to vector<8x48xf32>
    %c0_12 = arith.constant 0 : index
    %c0_13 = arith.constant 0 : index
    %23 = vector.load %arg6[%c0_12, %c0_13] : memref<8x48xf32, #tpu.memory_space<vmem>>, vector<8x48xf32>
    %24 = arith.mulf %22, %23 : vector<8x48xf32>
    %25 = arith.addf %21, %24 : vector<8x48xf32>
    %26 = vector.extract_strided_slice %25 {offsets = [0, 0], sizes = [8, 32], strides = [1, 1]} : vector<8x48xf32> to vector<8x32xf32>
    %27 = vector.extract_strided_slice %25 {offsets = [0, 32], sizes = [8, 16], strides = [1, 1]} : vector<8x48xf32> to vector<8x16xf32>
    %28 = vector.extract_strided_slice %18 {offsets = [0, 48], sizes = [8, 16], strides = [1, 1]} : vector<8x112xf32> to vector<8x16xf32>
    %29 = tpu.iota {dimensions = array<i32: 0>} : vector<8x8xi32>
    %30 = tpu.iota {dimensions = array<i32: 1>} : vector<8x8xi32>
    %31 = arith.cmpi sle, %30, %29 : vector<8x8xi32>
    %cst_14 = arith.constant 0.000000e+00 : f32
    %cst_15 = arith.constant -1.000000e+30 : f32
    %32 = vector.broadcast %cst_14 : f32 to vector<8x8xf32>
    %33 = vector.broadcast %cst_15 : f32 to vector<8x8xf32>
    %34 = arith.select %31, %32, %33 : vector<8x8xi1>, vector<8x8xf32>
    %35 = tpu.concatenate %34, %34 in 0 : vector<8x8xf32>, vector<8x8xf32> -> vector<16x8xf32>
    %36 = vector.extract_strided_slice %27 {offsets = [0, 0], sizes = [8, 8], strides = [1, 1]} : vector<8x16xf32> to vector<8x8xf32>
    %37 = vector.extract_strided_slice %28 {offsets = [0, 0], sizes = [8, 8], strides = [1, 1]} : vector<8x16xf32> to vector<8x8xf32>
    %38 = vector.extract_strided_slice %26 {offsets = [0, 0], sizes = [8, 8], strides = [1, 1]} : vector<8x32xf32> to vector<8x8xf32>
    %39 = vector.extract_strided_slice %26 {offsets = [0, 8], sizes = [8, 8], strides = [1, 1]} : vector<8x32xf32> to vector<8x8xf32>
    %40 = tpu.concatenate %38, %39 in 0 : vector<8x8xf32>, vector<8x8xf32> -> vector<16x8xf32>
    %cst_16 = arith.constant dense<0.000000e+00> : vector<16x8xf32>
    %41 = tpu.matmul %40, %36, %cst_16 {dimension_numbers = #tpu.dot_dimension_numbers<[1], [1], [0], [0], [0, 0, 1, 0], [], []>} : vector<16x8xf32>, vector<8x8xf32>, vector<16x8xf32> -> vector<16x8xf32>
    %42 = arith.addf %41, %35 : vector<16x8xf32>
    %cst_17 = arith.constant dense<0xFF800000> : vector<16xf32>
    %43 = vector.multi_reduction <maximumf>, %42, %cst_17 [1] : vector<16x8xf32> to vector<16xf32>
    %44 = vector.shape_cast %43 : vector<16xf32> to vector<16x1xf32>
    %45 = vector.broadcast %44 : vector<16x1xf32> to vector<16x8xf32>
    %46 = arith.subf %42, %45 : vector<16x8xf32>
    %47 = math.exp %46 : vector<16x8xf32>
    %cst_18 = arith.constant dense<0.000000e+00> : vector<16xf32>
    %48 = vector.multi_reduction <add>, %47, %cst_18 [1] : vector<16x8xf32> to vector<16xf32>
    %49 = vector.shape_cast %48 : vector<16xf32> to vector<16x1xf32>
    %50 = tpu.reciprocal %49 {approx = true} : vector<16x1xf32> -> vector<16x1xf32>
    %51 = vector.broadcast %50 : vector<16x1xf32> to vector<16x8xf32>
    %52 = arith.mulf %47, %51 : vector<16x8xf32>
    %cst_19 = arith.constant dense<0.000000e+00> : vector<16x8xf32>
    %53 = tpu.matmul %52, %37, %cst_19 {dimension_numbers = #tpu.dot_dimension_numbers<[1], [0], [0], [1], [0, 0, 1, 1], [], []>} : vector<16x8xf32>, vector<8x8xf32>, vector<16x8xf32> -> vector<16x8xf32>
    %54 = vector.extract_strided_slice %53 {offsets = [0, 0], sizes = [8, 8], strides = [1, 1]} : vector<16x8xf32> to vector<8x8xf32>
    %55 = vector.extract_strided_slice %53 {offsets = [8, 0], sizes = [8, 8], strides = [1, 1]} : vector<16x8xf32> to vector<8x8xf32>
    %56 = vector.extract_strided_slice %27 {offsets = [0, 8], sizes = [8, 8], strides = [1, 1]} : vector<8x16xf32> to vector<8x8xf32>
    %57 = vector.extract_strided_slice %28 {offsets = [0, 8], sizes = [8, 8], strides = [1, 1]} : vector<8x16xf32> to vector<8x8xf32>
    %58 = vector.extract_strided_slice %26 {offsets = [0, 16], sizes = [8, 8], strides = [1, 1]} : vector<8x32xf32> to vector<8x8xf32>
    %59 = vector.extract_strided_slice %26 {offsets = [0, 24], sizes = [8, 8], strides = [1, 1]} : vector<8x32xf32> to vector<8x8xf32>
    %60 = tpu.concatenate %58, %59 in 0 : vector<8x8xf32>, vector<8x8xf32> -> vector<16x8xf32>
    %cst_20 = arith.constant dense<0.000000e+00> : vector<16x8xf32>
    %61 = tpu.matmul %60, %56, %cst_20 {dimension_numbers = #tpu.dot_dimension_numbers<[1], [1], [0], [0], [0, 0, 1, 0], [], []>} : vector<16x8xf32>, vector<8x8xf32>, vector<16x8xf32> -> vector<16x8xf32>
    %62 = arith.addf %61, %35 : vector<16x8xf32>
    %cst_21 = arith.constant dense<0xFF800000> : vector<16xf32>
    %63 = vector.multi_reduction <maximumf>, %62, %cst_21 [1] : vector<16x8xf32> to vector<16xf32>
    %64 = vector.shape_cast %63 : vector<16xf32> to vector<16x1xf32>
    %65 = vector.broadcast %64 : vector<16x1xf32> to vector<16x8xf32>
    %66 = arith.subf %62, %65 : vector<16x8xf32>
    %67 = math.exp %66 : vector<16x8xf32>
    %cst_22 = arith.constant dense<0.000000e+00> : vector<16xf32>
    %68 = vector.multi_reduction <add>, %67, %cst_22 [1] : vector<16x8xf32> to vector<16xf32>
    %69 = vector.shape_cast %68 : vector<16xf32> to vector<16x1xf32>
    %70 = tpu.reciprocal %69 {approx = true} : vector<16x1xf32> -> vector<16x1xf32>
    %71 = vector.broadcast %70 : vector<16x1xf32> to vector<16x8xf32>
    %72 = arith.mulf %67, %71 : vector<16x8xf32>
    %cst_23 = arith.constant dense<0.000000e+00> : vector<16x8xf32>
    %73 = tpu.matmul %72, %57, %cst_23 {dimension_numbers = #tpu.dot_dimension_numbers<[1], [0], [0], [1], [0, 0, 1, 1], [], []>} : vector<16x8xf32>, vector<8x8xf32>, vector<16x8xf32> -> vector<16x8xf32>
    %74 = vector.extract_strided_slice %73 {offsets = [0, 0], sizes = [8, 8], strides = [1, 1]} : vector<16x8xf32> to vector<8x8xf32>
    %75 = vector.extract_strided_slice %73 {offsets = [8, 0], sizes = [8, 8], strides = [1, 1]} : vector<16x8xf32> to vector<8x8xf32>
    %76 = tpu.concatenate %54, %55, %74, %75 in 1 : vector<8x8xf32>, vector<8x8xf32>, vector<8x8xf32>, vector<8x8xf32> -> vector<8x32xf32>
    %c0_24 = arith.constant 0 : index
    %c0_25 = arith.constant 0 : index
    %77 = vector.load %arg7[%c0_24, %c0_25] : memref<32x32xf32, #tpu.memory_space<vmem>>, vector<32x32xf32>
    %cst_26 = arith.constant dense<0.000000e+00> : vector<8x32xf32>
    %78 = tpu.matmul %76, %77, %cst_26 {dimension_numbers = #tpu.dot_dimension_numbers<[1], [0], [0], [1], [0, 0, 1, 1], [], []>} : vector<8x32xf32>, vector<32x32xf32>, vector<8x32xf32> -> vector<8x32xf32>
    %79 = arith.addf %78, %0 : vector<8x32xf32>
    %80 = arith.mulf %79, %79 : vector<8x32xf32>
    %cst_27 = arith.constant dense<0.000000e+00> : vector<8xf32>
    %81 = vector.multi_reduction <add>, %80, %cst_27 [1] : vector<8x32xf32> to vector<8xf32>
    %82 = vector.shape_cast %81 : vector<8xf32> to vector<8x1xf32>
    %cst_28 = arith.constant 3.200000e+01 : f32
    %83 = vector.broadcast %cst_28 : f32 to vector<8x1xf32>
    %84 = arith.divf %82, %83 : vector<8x1xf32>
    %cst_29 = arith.constant 9.99999974E-6 : f32
    %85 = vector.broadcast %cst_29 : f32 to vector<8x1xf32>
    %86 = arith.addf %84, %85 : vector<8x1xf32>
    %87 = math.rsqrt %86 : vector<8x1xf32>
    %88 = vector.broadcast %87 : vector<8x1xf32> to vector<8x32xf32>
    %89 = arith.mulf %79, %88 : vector<8x32xf32>
    %c0_30 = arith.constant 0 : index
    %c0_31 = arith.constant 0 : index
    %90 = vector.load %arg8[%c0_30, %c0_31] : memref<1x32xf32, #tpu.memory_space<vmem>>, vector<1x32xf32>
    %91 = vector.broadcast %90 : vector<1x32xf32> to vector<8x32xf32>
    %92 = arith.mulf %89, %91 : vector<8x32xf32>
    %c0_32 = arith.constant 0 : index
    %c0_33 = arith.constant 0 : index
    %93 = vector.load %arg9[%c0_32, %c0_33] : memref<32x128xf32, #tpu.memory_space<vmem>>, vector<32x128xf32>
    %cst_34 = arith.constant dense<0.000000e+00> : vector<8x128xf32>
    %94 = tpu.matmul %92, %93, %cst_34 {dimension_numbers = #tpu.dot_dimension_numbers<[1], [0], [0], [1], [0, 0, 1, 1], [], []>} : vector<8x32xf32>, vector<32x128xf32>, vector<8x128xf32> -> vector<8x128xf32>
    %95 = vector.extract_strided_slice %94 {offsets = [0, 0], sizes = [8, 64], strides = [1, 1]} : vector<8x128xf32> to vector<8x64xf32>
    %96 = vector.extract_strided_slice %94 {offsets = [0, 64], sizes = [8, 64], strides = [1, 1]} : vector<8x128xf32> to vector<8x64xf32>
    %97 = arith.negf %95 : vector<8x64xf32>
    %98 = math.exp %97 : vector<8x64xf32>
    %cst_35 = arith.constant 1.000000e+00 : f32
    %99 = vector.broadcast %cst_35 : f32 to vector<8x64xf32>
    %100 = arith.addf %99, %98 : vector<8x64xf32>
    %101 = arith.divf %99, %100 : vector<8x64xf32>
    %102 = arith.mulf %95, %101 : vector<8x64xf32>
    %103 = arith.mulf %102, %96 : vector<8x64xf32>
    %c0_36 = arith.constant 0 : index
    %c0_37 = arith.constant 0 : index
    %104 = vector.load %arg10[%c0_36, %c0_37] : memref<64x32xf32, #tpu.memory_space<vmem>>, vector<64x32xf32>
    %cst_38 = arith.constant dense<0.000000e+00> : vector<8x32xf32>
    %105 = tpu.matmul %103, %104, %cst_38 {dimension_numbers = #tpu.dot_dimension_numbers<[1], [0], [0], [1], [0, 0, 1, 1], [], []>} : vector<8x64xf32>, vector<64x32xf32>, vector<8x32xf32> -> vector<8x32xf32>
    %106 = arith.addf %105, %79 : vector<8x32xf32>
    %c0_39 = arith.constant 0 : index
    %c0_40 = arith.constant 0 : index
    %107 = vector.load %arg11[%c0_39, %c0_40] : memref<8x32xf32, #tpu.memory_space<vmem>>, vector<8x32xf32>
    tpu.vector_store %arg11[%c0_39, %c0_40], %106 {strides = array<i32>} : memref<8x32xf32, #tpu.memory_space<vmem>>, vector<8x32xf32>,
    return
  }
  func.func @transform_0(%arg0: i32) -> (i32, i32) {
    %c0_i32 = arith.constant 0 : i32
    %c0_i32_0 = arith.constant 0 : i32
    %c0_i32_1 = arith.constant 0 : i32
    return %c0_i32, %c0_i32_0 : i32, i32
  }
  func.func @transform_1(%arg0: i32) -> (i32, i32) {
    %c0_i32 = arith.constant 0 : i32
    %c0_i32_0 = arith.constant 0 : i32
    %c0_i32_1 = arith.constant 0 : i32
    return %c0_i32, %c0_i32_0 : i32, i32
  }
  func.func @transform_2(%arg0: i32) -> (i32, i32) {
    %c0_i32 = arith.constant 0 : i32
    %c0_i32_0 = arith.constant 0 : i32
    %c0_i32_1 = arith.constant 0 : i32
    return %c0_i32, %c0_i32_0 : i32, i32
  }
  func.func @transform_3(%arg0: i32) -> (i32, i32) {
    %c0_i32 = arith.constant 0 : i32
    %c0_i32_0 = arith.constant 0 : i32
    %c0_i32_1 = arith.constant 0 : i32
    return %c0_i32, %c0_i32_0 : i32, i32
  }
  func.func @transform_4(%arg0: i32) -> (i32, i32) {
    %c0_i32 = arith.constant 0 : i32
    %c0_i32_0 = arith.constant 0 : i32
    %c0_i32_1 = arith.constant 0 : i32
    return %c0_i32, %c0_i32_0 : i32, i32
  }
  func.func @transform_5(%arg0: i32) -> (i32, i32) {
    %c0_i32 = arith.constant 0 : i32
    %c0_i32_0 = arith.constant 0 : i32
    %c0_i32_1 = arith.constant 0 : i32
    return %c0_i32, %c0_i32_0 : i32, i32
  }
  func.func @transform_6(%arg0: i32) -> (i32, i32) {
    %c0_i32 = arith.constant 0 : i32
    %c0_i32_0 = arith.constant 0 : i32
    %c0_i32_1 = arith.constant 0 : i32
    return %c0_i32, %c0_i32_0 : i32, i32
  }
  func.func @transform_7(%arg0: i32) -> (i32, i32) {
    %c0_i32 = arith.constant 0 : i32
    %c0_i32_0 = arith.constant 0 : i32
    %c0_i32_1 = arith.constant 0 : i32
    return %c0_i32, %c0_i32_0 : i32, i32
  }
  func.func @transform_8(%arg0: i32) -> (i32, i32) {
    %c0_i32 = arith.constant 0 : i32
    %c0_i32_0 = arith.constant 0 : i32
    %c0_i32_1 = arith.constant 0 : i32
    return %c0_i32, %c0_i32_0 : i32, i32
  }
  func.func @transform_9(%arg0: i32) -> (i32, i32) {
    %c0_i32 = arith.constant 0 : i32
    %c0_i32_0 = arith.constant 0 : i32
    %c0_i32_1 = arith.constant 0 : i32
    return %c0_i32, %c0_i32_0 : i32, i32
  }
  func.func @transform_10(%arg0: i32) -> (i32, i32) {
    %c0_i32 = arith.constant 0 : i32
    %c0_i32_0 = arith.constant 0 : i32
    %c0_i32_1 = arith.constant 0 : i32
    return %c0_i32, %c0_i32_0 : i32, i32
  }
}

</mosaic_0001>

<llo_original>
// kernel: mul.21
$region0: #{mul.21}
  %s0 = inlined_call_operand.vmem [shape: f32[2,2], index: 0, kind: input, shape index: {}]
  %s1 = inlined_call_operand.vmem [shape: f32[4], index: 1, kind: output, shape index: {}]
  $region1: #{mul.21} parent=0
    #allocation0 [shape = 'u8[4096]{0}', space=vmem, size = 0x1000, scoped, tag = 'scoped mem for output reshape']
    #allocation1 [shape = 'u8[4096]{0}', space=vmem, size = 0x1000, scoped, tag = 'scoped mem for input reshape']
    %s3 = sshll.u32 1, 2
    %s4 = ssub.s32 %s3, 1
    %v5 = vld [vmem:[%s0] sm:%s4]
    %6 = vst [vmem:[#allocation1] sm:%s4] %v5
    %v7 = vld [vmem:[#allocation1] sm:$0x1]
    %vm8 = vcmask 15360
    %9 = vst.msk [vmem:[#allocation0] sm:$0x1] %vm8, %v7
    %s10 = scalar_lea.vmem [#allocation1], 1
    %v11 = vld [vmem:[%s10] sm:$0x1]
    %12 = vrot.lane.b32.xlu0 %v11, 2
    %v13 = vpop.permute.xlu0 %12
    %vm14 = vcmask 31760
    %15 = vst.msk [vmem:[#allocation0] sm:$0x1] %vm14, %v13
    %s17 = sshll.u32 1, 1
    %s18 = ssub.s32 %s17, 1
    %v20 = vld [vmem:[#allocation0] sm:%s18]
    %s21 = sshll.u32 1, 1
    %s22 = ssub.s32 %s21, 1
    %23 = vst [vmem:[%s1] sm:%s22] %v20

// kernel: tile.16
$region0: #{tile.16}
  #allocation0 [shape = 's32[1]{0}', space=sflag, size = 0x4, scoped, tag = 'scoped memory for tile.16']
  %s0 = inlined_call_operand.vmem [shape: f32[2], index: 0, kind: input, shape index: {}]
  %s1 = inlined_call_operand.vmem [shape: f32[2,2], index: 1, kind: output, shape index: {}]
  // Predicated region
  $region2: #{tile.16} parent=0 // pred_check
    _
  $region3: #{tile.16} parent=0 // pred_check_branch
    %3 = sbr.rel (0) target = $region5
  $region4: #{tile.16} parent=0 // pred_region
    _
  $region5: #{tile.16} parent=0 // pred_fallthru
    _
  %v4 = vld [vmem:[%s0] ss:$0 sm:$0xff]
  %5 = vst [vmem:[%s1] sm:$0x3] %v4

// kernel: tile.22
$region0: #{tile.22}
  %s0 = inlined_call_operand.vmem [shape: f32[8,6,8], index: 0, kind: input, shape index: {}]
  %s1 = inlined_call_operand.vmem [shape: f32[8,48], index: 1, kind: output, shape index: {}]
  %v2 = vld [vmem:[%s0] ss:$8 sm:$0xf]
  %v3 = vld [vmem:[%s0] ss:$8 sm:$0xf0]
  %vm4 = vcmask 1047556
  %v5 = vsel %vm4, %v3, %v2
  %vm6 = vcmask 64512
  %7 = vst.msk [vmem:[%s1] sm:$0xff] %vm6, %v5
  %s8 = scalar_lea.vmem %s0, 5
  %v9 = vld [vmem:[%s8] ss:$8 sm:$0xf]
  %s10 = scalar_lea.vmem %s0, 5
  %v11 = vld [vmem:[%s10] ss:$8 sm:$0xf0]
  %vm12 = vcmask 1047556
  %v13 = vsel %vm12, %v11, %v9
  %14 = vrot.lane.b32.xlu0 %v13, 40
  %v15 = vpop.permute.xlu0 %14
  %vm16 = vcmask 392512
  %17 = vst.msk [vmem:[%s1] sm:$0xff] %vm16, %v15
  %s18 = scalar_lea.vmem %s0, 4
  %v19 = vld [vmem:[%s18] ss:$8 sm:$0xf]
  %s20 = scalar_lea.vmem %s0, 4
  %v21 = vld [vmem:[%s20] ss:$8 sm:$0xf0]
  %vm22 = vcmask 1047556
  %v23 = vsel %vm22, %v21, %v19
  %24 = vrot.lane.b32.xlu0 %v23, 32
  %v25 = vpop.permute.xlu0 %24
  %vm26 = vcmask 326912
  %27 = vst.msk [vmem:[%s1] sm:$0xff] %vm26, %v25
  %s28 = scalar_lea.vmem %s0, 3
  %v29 = vld [vmem:[%s28] ss:$8 sm:$0xf]
  %s30 = scalar_lea.vmem %s0, 3
  %v31 = vld [vmem:[%s30] ss:$8 sm:$0xf0]
  %vm32 = vcmask 1047556
  %v33 = vsel %vm32, %v31, %v29
  %34 = vrot.lane.b32.xlu0 %v33, 24
  %v35 = vpop.permute.xlu0 %34
  %vm36 = vcmask 261312
  %37 = vst.msk [vmem:[%s1] sm:$0xff] %vm36, %v35
  %s38 = scalar_lea.vmem %s0, 2
  %v39 = vld [vmem:[%s38] ss:$8 sm:$0xf]
  %s40 = scalar_lea.vmem %s0, 2
  %v41 = vld [vmem:[%s40] ss:$8 sm:$0xf0]
  %vm42 = vcmask 1047556
  %v43 = vsel %vm42, %v41, %v39
  %44 = vrot.lane.b32.xlu0 %v43, 16
  %v45 = vpop.permute.xlu0 %44
  %vm46 = vcmask 195712
  %47 = vst.msk [vmem:[%s1] sm:$0xff] %vm46, %v45
  %s48 = scalar_lea.vmem %s0, 1
  %v49 = vld [vmem:[%s48] ss:$8 sm:$0xf]
  %s50 = scalar_lea.vmem %s0, 1
  %v51 = vld [vmem:[%s50] ss:$8 sm:$0xf0]
  %vm52 = vcmask 1047556
  %v53 = vsel %vm52, %v51, %v49
  %54 = vrot.lane.b32.xlu0 %v53, 8
  %v55 = vpop.permute.xlu0 %54
  %vm56 = vcmask 130112
  %57 = vst.msk [vmem:[%s1] sm:$0xff] %vm56, %v55

// kernel: glm_block.1
$region0: #{glm_block.1}
  #allocation0 [shape = 'u32[]', space=smem, size = 0x4, offset = 0x4, fixed_abs, tag = 'smem constant byte address 0x4 - core index']
  #allocation1 [shape = 'u32[144,128]{1,0:T(1,128)}', space=vmem, size = 0x12000, scoped, tag = 'internal scratch']
  %s0 = inlined_call_operand.vmem [shape: f32[8,32], index: 0, kind: input, shape index: {}]
  %s1 = inlined_call_operand.vmem [shape: f32[1,32], index: 1, kind: input, shape index: {}]
  %s2 = inlined_call_operand.vmem [shape: f32[32,112], index: 2, kind: input, shape index: {}]
  %s3 = inlined_call_operand.vmem [shape: f32[1,112], index: 3, kind: input, shape index: {}]
  %s4 = inlined_call_operand.vmem [shape: f32[8,48], index: 4, kind: input, shape index: {}]
  %s5 = inlined_call_operand.vmem [shape: f32[8,48], index: 5, kind: input, shape index: {}]
  %s6 = inlined_call_operand.vmem [shape: f32[32,32], index: 6, kind: input, shape index: {}]
  %s7 = inlined_call_operand.vmem [shape: f32[1,32], index: 7, kind: input, shape index: {}]
  %s8 = inlined_call_operand.vmem [shape: f32[32,128], index: 8, kind: input, shape index: {}]
  %s9 = inlined_call_operand.vmem [shape: f32[64,32], index: 9, kind: input, shape index: {}]
  %s10 = inlined_call_operand.hbm [shape: f32[8,32], index: 10, kind: output, shape index: {}]
  %s11 = sld [smem:[#allocation0]]
  $region50: #{glm_block.1} parent=0
    _
  %s13 = ssub.s32 1, %s11
  %s14 = scalar_select 0, %s13, %s11
  $region1: #{glm_block.1} parent=0
    #allocation2 [shape = 'u8[4096]{0}', space=vmem, size = 0x1000, scoped, tag = 'output window, operand 0, single buffered']
    #allocation3 [shape = 's32[1]{0}', space=sflag, size = 0x4, scoped, tag = 'scoped memory for glm_block.1']
    %15 = vsyncpa [#allocation3], 0
    // Predicated region
    $region2: #{glm_block.1} parent=1 // pred_check
      _
    $region3: #{glm_block.1} parent=1 // pred_check_branch
      %17 = sbr.rel (0) target = $region5
    $region4: #{glm_block.1} parent=1 // pred_region
      _
    $region5: #{glm_block.1} parent=1 // pred_fallthru
      _
    // Predicated region
    $region6: #{glm_block.1} parent=1 // pred_check
      _
    $region7: #{glm_block.1} parent=1 // pred_check_branch
      %19 = sbr.rel (0) target = $region9
    $region8: #{glm_block.1} parent=1 // pred_region
      _
    $region9: #{glm_block.1} parent=1 // pred_fallthru
      _
    // Predicated region
    $region10: #{glm_block.1} parent=1 // pred_check
      _
    $region11: #{glm_block.1} parent=1 // pred_check_branch
      %21 = sbr.rel (0) target = $region13
    $region12: #{glm_block.1} parent=1 // pred_region
      _
    $region13: #{glm_block.1} parent=1 // pred_fallthru
      _
    // Predicated region
    $region14: #{glm_block.1} parent=1 // pred_check
      _
    $region15: #{glm_block.1} parent=1 // pred_check_branch
      %23 = sbr.rel (0) target = $region17
    $region16: #{glm_block.1} parent=1 // pred_region
      _
    $region17: #{glm_block.1} parent=1 // pred_fallthru
      _
    // Predicated region
    $region18: #{glm_block.1} parent=1 // pred_check
      _
    $region19: #{glm_block.1} parent=1 // pred_check_branch
      %25 = sbr.rel (0) target = $region21
    $region20: #{glm_block.1} parent=1 // pred_region
      _
    $region21: #{glm_block.1} parent=1 // pred_fallthru
      _
    // Predicated region
    $region22: #{glm_block.1} parent=1 // pred_check
      _
    $region23: #{glm_block.1} parent=1 // pred_check_branch
      %27 = sbr.rel (0) target = $region25
    $region24: #{glm_block.1} parent=1 // pred_region
      _
    $region25: #{glm_block.1} parent=1 // pred_fallthru
      _
    // Predicated region
    $region26: #{glm_block.1} parent=1 // pred_check
      _
    $region27: #{glm_block.1} parent=1 // pred_check_branch
      %29 = sbr.rel (0) target = $region29
    $region28: #{glm_block.1} parent=1 // pred_region
      _
    $region29: #{glm_block.1} parent=1 // pred_fallthru
      _
    // Predicated region
    $region30: #{glm_block.1} parent=1 // pred_check
      _
    $region31: #{glm_block.1} parent=1 // pred_check_branch
      %31 = sbr.rel (0) target = $region33
    $region32: #{glm_block.1} parent=1 // pred_region
      _
    $region33: #{glm_block.1} parent=1 // pred_fallthru
      _
    // Predicated region
    $region34: #{glm_block.1} parent=1 // pred_check
      _
    $region35: #{glm_block.1} parent=1 // pred_check_branch
      %33 = sbr.rel (0) target = $region37
    $region36: #{glm_block.1} parent=1 // pred_region
      _
    $region37: #{glm_block.1} parent=1 // pred_fallthru
      _
    // Predicated region
    $region38: #{glm_block.1} parent=1 // pred_check
      _
    $region39: #{glm_block.1} parent=1 // pred_check_branch
      %35 = sbr.rel (0) target = $region41
    $region40: #{glm_block.1} parent=1 // pred_region
      _
    $region41: #{glm_block.1} parent=1 // pred_fallthru
      _
    %v36 = vld [vmem:[%s0] sm:$0xff]
    %v37 = vmul.f32 %v36, %v36
    %vm38 = vcmask 261120
    %v39 = vsel %vm38, %v37, 0.0
    %40 = vadd.xlane.f32.xlu0 %v39
    %v41 = vpop.xlane.xlu0 %40
    %v42 = vrcp.pop 32.0
    %v43 = vmul.f32 %v41, %v42
    %v44 = vadd.f32 %v43, 1e-05
    %v45 = vrsqrt.pop %v44
    %v46 = vmul.f32 %v36, %v45
    %v47 = vld [vmem:[%s1] sm:$0x1]
    %v49 = vlaneseq
    %v50 = vshrl.u32 %v49, 7
    %v51 = vsub.s32 0, %v50
    %v52 = vrot.slane %v47, %v51
    %v54 = vmul.f32 %v46, %v52
    %v55 = vld [vmem:[%s2] sm:$0xff]
    %v56 = vld [vmem:[%s2 + $0x8] sm:$0xff]
    %v57 = vld [vmem:[%s2 + $0x10] sm:$0xff]
    %v58 = vld [vmem:[%s2 + $0x18] sm:$0xff]
    %v59 = vld [vmem:[%s3] sm:$0x1]
    %v61 = vlaneseq
    %v62 = vshrl.u32 %v61, 7
    %v63 = vsub.s32 0, %v62
    %v64 = vrot.slane %v59, %v63
    %v67 = vsel %vm38, %v54, 0
    %69 = vmatprep.subr.mxu0 0.0
    %70 = vmatpush1.msra.mxu0 0.0
    %71 = vmatprep.subr.mxu0 0.0
    %72 = vmatpush1.msra.mxu0 0.0
    %73 = vmatprep.subr.mxu0 0.0
    %74 = vmatpush1.msra.mxu0 0.0
    %75 = vmatprep.subr.mxu0 0.0
    %76 = vmatpush1.msra.mxu0 0.0
    %77 = vmatprep.subr.mxu0 0.0
    %78 = vmatpush1.msra.mxu0 0.0
    %79 = vmatprep.subr.mxu0 0.0
    %80 = vmatpush1.msra.mxu0 0.0
    %81 = vmatprep.subr.mxu0 0.0
    %82 = vmatpush1.msra.mxu0 0.0
    %83 = vmatprep.subr.mxu0 0.0
    %84 = vmatpush1.msra.mxu0 0.0
    %85 = vmatprep.subr.mxu0 0.0
    %86 = vmatpush1.msra.mxu0 0.0
    %87 = vmatprep.subr.mxu0 0.0
    %88 = vmatpush1.msra.mxu0 0.0
    %89 = vmatprep.subr.mxu0 0.0
    %90 = vmatpush1.msra.mxu0 0.0
    %91 = vmatprep.subr.mxu0 0.0
    %92 = vmatpush1.msra.mxu0 0.0
    %93 = vmatprep.subr.mxu0 0.0
    %94 = vmatpush1.msra.mxu0 %v58
    %95 = vmatprep.subr.mxu0 0.0
    %96 = vmatpush1.msra.mxu0 %v57
    %97 = vmatprep.subr.mxu0 0.0
    %98 = vmatpush1.msra.mxu0 %v56
    %99 = vmatprep.subr.mxu0 0.0
    %100 = vmatpush1.msra.mxu0 %v55
    %101 = vmatprep.subr.mxu0 0.0
    %102 = vmatpush2.msra.mxu0 0.0
    %103 = vmatprep.subr.mxu0 0.0
    %104 = vmatpush2.msra.mxu0 0.0
    %105 = vmatprep.subr.mxu0 0.0
    %106 = vmatpush2.msra.mxu0 0.0
    %107 = vmatprep.subr.mxu0 0.0
    %108 = vmatpush2.msra.mxu0 0.0
    %109 = vmatprep.subr.mxu0 0.0
    %110 = vmatpush2.msra.mxu0 0.0
    %111 = vmatprep.subr.mxu0 0.0
    %112 = vmatpush2.msra.mxu0 0.0
    %113 = vmatprep.subr.mxu0 0.0
    %114 = vmatpush2.msra.mxu0 0.0
    %115 = vmatprep.subr.mxu0 0.0
    %116 = vmatpush2.msra.mxu0 0.0
    %117 = vmatprep.subr.mxu0 0.0
    %118 = vmatpush2.msra.mxu0 0.0
    %119 = vmatprep.subr.mxu0 0.0
    %120 = vmatpush2.msra.mxu0 0.0
    %121 = vmatprep.subr.mxu0 0.0
    %122 = vmatpush2.msra.mxu0 0.0
    %123 = vmatprep.subr.mxu0 0.0
    %124 = vmatpush2.msra.mxu0 0.0
    %125 = vmatprep.subr.mxu0 0.0
    %126 = vmatpush2.msra.mxu0 0.0
    %127 = vmatprep.subr.mxu0 0.0
    %128 = vmatpush2.msra.mxu0 0.0
    %129 = vmatprep.subr.mxu0 0.0
    %130 = vmatpush2.msra.mxu0 0.0
    %131 = vmatprep.subr.mxu0 0.0
    %132 = vmatpush2.msra.mxu0 0.0
    %133 = vmatprep.mubr.f32.mxu0 0.0
    %134 = vmatmul.mubr.f32.gmra.mxu0 %v67
    %v135 = vpop.f32.mrf.mxu0
    %v136 = vadd.f32 %v64, %v135
    %v137 = vpop.f32.mrf.mxu0
    %138 = vdwg.mxu0
    %v139 = vld [vmem:[%s4] sm:$0xff]
    %v140 = vmul.f32 %v136, %v139
    %v141 = vld [vmem:[%s5] sm:$0xff]
    %143 = vrot.lane.b32.xlu0 %v141, 64
    %v144 = vpop.permute.xlu0 %143
    %v146 = vmul.f32 %v136, %v144
    %148 = vrot.lane.b32.xlu0 %v146, 64
    %v149 = vpop.permute.xlu0 %148
    %v151 = vadd.f32 %v140, %v149
    %v152 = vlaneseq
    %v153 = vshrl.u32 %v152, 7
    %v154 = vlaneseq
    %v155 = vand.u32 %v154, 127
    %vm156 = vcmp.le.s32.totalorder %v155, %v153
    %v157 = vsel %vm156, 0.0, -1e+30
    %159 = vrot.lane.b32.xlu0 %v151, 120
    %v160 = vpop.permute.xlu0 %159
    %161 = vrot.lane.b32.xlu0 %v151, 96
    %v162 = vpop.permute.xlu0 %161
    %vm163 = vcmask 64512
    %v164 = vsel %vm163, %v151, 0
    %v166 = vsel %vm163, %v160, 0
    %v168 = vsel %vm163, %v162, 0
    %170 = vmatprep.subr.mxu0 0.0
    %171 = vmatpush1.xpose.msra.mxu0 0.0
    %172 = vmatprep.subr.mxu0 0.0
    %173 = vmatpush1.xpose.msra.mxu0 0.0
    %174 = vmatprep.subr.mxu0 0.0
    %175 = vmatpush1.xpose.msra.mxu0 0.0
    %176 = vmatprep.subr.mxu0 0.0
    %177 = vmatpush1.xpose.msra.mxu0 0.0
    %178 = vmatprep.subr.mxu0 0.0
    %179 = vmatpush1.xpose.msra.mxu0 0.0
    %180 = vmatprep.subr.mxu0 0.0
    %181 = vmatpush1.xpose.msra.mxu0 0.0
    %182 = vmatprep.subr.mxu0 0.0
    %183 = vmatpush1.xpose.msra.mxu0 0.0
    %184 = vmatprep.subr.mxu0 0.0
    %185 = vmatpush1.xpose.msra.mxu0 0.0
    %186 = vmatprep.subr.mxu0 0.0
    %187 = vmatpush1.xpose.msra.mxu0 0.0
    %188 = vmatprep.subr.mxu0 0.0
    %189 = vmatpush1.xpose.msra.mxu0 0.0
    %190 = vmatprep.subr.mxu0 0.0
    %191 = vmatpush1.xpose.msra.mxu0 0.0
    %192 = vmatprep.subr.mxu0 0.0
    %193 = vmatpush1.xpose.msra.mxu0 0.0
    %194 = vmatprep.subr.mxu0 0.0
    %195 = vmatpush1.xpose.msra.mxu0 0.0
    %196 = vmatprep.subr.mxu0 0.0
    %197 = vmatpush1.xpose.msra.mxu0 0.0
    %198 = vmatprep.subr.mxu0 0.0
    %199 = vmatpush1.xpose.msra.mxu0 0.0
    %200 = vmatprep.subr.mxu0 0.0
    %201 = vmatpush1.xpose.msra.mxu0 %v168
    %202 = vmatprep.subr.mxu0 0.0
    %203 = vmatpush2.xpose.msra.mxu0 0.0
    %204 = vmatprep.subr.mxu0 0.0
    %205 = vmatpush2.xpose.msra.mxu0 0.0
    %206 = vmatprep.subr.mxu0 0.0
    %207 = vmatpush2.xpose.msra.mxu0 0.0
    %208 = vmatprep.subr.mxu0 0.0
    %209 = vmatpush2.xpose.msra.mxu0 0.0
    %210 = vmatprep.subr.mxu0 0.0
    %211 = vmatpush2.xpose.msra.mxu0 0.0
    %212 = vmatprep.subr.mxu0 0.0
    %213 = vmatpush2.xpose.msra.mxu0 0.0
    %214 = vmatprep.subr.mxu0 0.0
    %215 = vmatpush2.xpose.msra.mxu0 0.0
    %216 = vmatprep.subr.mxu0 0.0
    %217 = vmatpush2.xpose.msra.mxu0 0.0
    %218 = vmatprep.subr.mxu0 0.0
    %219 = vmatpush2.xpose.msra.mxu0 0.0
    %220 = vmatprep.subr.mxu0 0.0
    %221 = vmatpush2.xpose.msra.mxu0 0.0
    %222 = vmatprep.subr.mxu0 0.0
    %223 = vmatpush2.xpose.msra.mxu0 0.0
    %224 = vmatprep.subr.mxu0 0.0
    %225 = vmatpush2.xpose.msra.mxu0 0.0
    %226 = vmatprep.subr.mxu0 0.0
    %227 = vmatpush2.xpose.msra.mxu0 0.0
    %228 = vmatprep.subr.mxu0 0.0
    %229 = vmatpush2.xpose.msra.mxu0 0.0
    %230 = vmatprep.subr.mxu0 0.0
    %231 = vmatpush2.xpose.msra.mxu0 0.0
    %232 = vmatprep.subr.mxu0 0.0
    %233 = vmatpush2.xpose.msra.mxu0 0.0
    %234 = vmatprep.mubr.f32.mxu0 0.0
    %235 = vmatmul.mubr.f32.gmra.mxu0 %v164
    %v236 = vpop.f32.mrf.mxu0
    %v237 = vadd.f32 %v157, %v236
    %v238 = vpop.f32.mrf.mxu0
    %239 = vmatprep.mubr.f32.mxu0 0.0
    %240 = vmatmul.mubr.f32.gmra.mxu0 %v166
    %v241 = vpop.f32.mrf.mxu0
    %v242 = vadd.f32 %v157, %v241
    %v243 = vpop.f32.mrf.mxu0
    %244 = vdwg.mxu0
    %v245 = vsel %vm163, %v237, -inf
    %246 = vmax.xlane.f32.xlu0 %v245
    %v247 = vpop.xlane.xlu0 %246
    %v248 = vsel %vm163, %v242, -inf
    %249 = vmax.xlane.f32.xlu0 %v248
    %v250 = vpop.xlane.xlu0 %249
    %v251 = vsub.f32 %v237, %v247
    %v252 = vsub.f32 %v242, %v250
    %v253 = vmul.f32 %v251, 1.442695
    %v254 = vpow.pop %v253
    %v255 = vmul.f32 %v252, 1.442695
    %v256 = vpow.pop %v255
    %v257 = vsel %vm163, %v254, 0.0
    %258 = vadd.xlane.f32.xlu0 %v257
    %v259 = vpop.xlane.xlu0 %258
    %v260 = vsel %vm163, %v256, 0.0
    %261 = vadd.xlane.f32.xlu0 %v260
    %v262 = vpop.xlane.xlu0 %261
    %v263 = vrcp.pop %v259
    %v264 = vrcp.pop %v262
    %v265 = vmul.f32 %v254, %v263
    %v266 = vmul.f32 %v256, %v264
    %268 = vrot.lane.b32.xlu0 %v136, 80
    %v269 = vpop.permute.xlu0 %268
    %v272 = vsel %vm163, %v265, 0
    %v275 = vsel %vm163, %v266, 0
    %277 = vmatprep.subr.mxu0 0.0
    %278 = vmatpush1.msra.mxu0 0.0
    %279 = vmatprep.subr.mxu0 0.0
    %280 = vmatpush1.msra.mxu0 0.0
    %281 = vmatprep.subr.mxu0 0.0
    %282 = vmatpush1.msra.mxu0 0.0
    %283 = vmatprep.subr.mxu0 0.0
    %284 = vmatpush1.msra.mxu0 0.0
    %285 = vmatprep.subr.mxu0 0.0
    %286 = vmatpush1.msra.mxu0 0.0
    %287 = vmatprep.subr.mxu0 0.0
    %288 = vmatpush1.msra.mxu0 0.0
    %289 = vmatprep.subr.mxu0 0.0
    %290 = vmatpush1.msra.mxu0 0.0
    %291 = vmatprep.subr.mxu0 0.0
    %292 = vmatpush1.msra.mxu0 0.0
    %293 = vmatprep.subr.mxu0 0.0
    %294 = vmatpush1.msra.mxu0 0.0
    %295 = vmatprep.subr.mxu0 0.0
    %296 = vmatpush1.msra.mxu0 0.0
    %297 = vmatprep.subr.mxu0 0.0
    %298 = vmatpush1.msra.mxu0 0.0
    %299 = vmatprep.subr.mxu0 0.0
    %300 = vmatpush1.msra.mxu0 0.0
    %301 = vmatprep.subr.mxu0 0.0
    %302 = vmatpush1.msra.mxu0 0.0
    %303 = vmatprep.subr.mxu0 0.0
    %304 = vmatpush1.msra.mxu0 0.0
    %305 = vmatprep.subr.mxu0 0.0
    %306 = vmatpush1.msra.mxu0 0.0
    %307 = vmatprep.subr.mxu0 0.0
    %308 = vmatpush1.msra.mxu0 %v269
    %309 = vmatprep.subr.mxu0 0.0
    %310 = vmatpush2.msra.mxu0 0.0
    %311 = vmatprep.subr.mxu0 0.0
    %312 = vmatpush2.msra.mxu0 0.0
    %313 = vmatprep.subr.mxu0 0.0
    %314 = vmatpush2.msra.mxu0 0.0
    %315 = vmatprep.subr.mxu0 0.0
    %316 = vmatpush2.msra.mxu0 0.0
    %317 = vmatprep.subr.mxu0 0.0
    %318 = vmatpush2.msra.mxu0 0.0
    %319 = vmatprep.subr.mxu0 0.0
    %320 = vmatpush2.msra.mxu0 0.0
    %321 = vmatprep.subr.mxu0 0.0
    %322 = vmatpush2.msra.mxu0 0.0
    %323 = vmatprep.subr.mxu0 0.0
    %324 = vmatpush2.msra.mxu0 0.0
    %325 = vmatprep.subr.mxu0 0.0
    %326 = vmatpush2.msra.mxu0 0.0
    %327 = vmatprep.subr.mxu0 0.0
    %328 = vmatpush2.msra.mxu0 0.0
    %329 = vmatprep.subr.mxu0 0.0
    %330 = vmatpush2.msra.mxu0 0.0
    %331 = vmatprep.subr.mxu0 0.0
    %332 = vmatpush2.msra.mxu0 0.0
    %333 = vmatprep.subr.mxu0 0.0
    %334 = vmatpush2.msra.mxu0 0.0
    %335 = vmatprep.subr.mxu0 0.0
    %336 = vmatpush2.msra.mxu0 0.0
    %337 = vmatprep.subr.mxu0 0.0
    %338 = vmatpush2.msra.mxu0 0.0
    %339 = vmatprep.subr.mxu0 0.0
    %340 = vmatpush2.msra.mxu0 0.0
    %341 = vmatprep.mubr.f32.mxu0 0.0
    %342 = vmatmul.mubr.f32.gmra.mxu0 %v272
    %v343 = vpop.f32.mrf.mxu0
    %v344 = vadd.f32 0.0, %v343
    %v345 = vpop.f32.mrf.mxu0
    %346 = vmatprep.mubr.f32.mxu0 0.0
    %347 = vmatmul.mubr.f32.gmra.mxu0 %v275
    %v348 = vpop.f32.mrf.mxu0
    %v349 = vadd.f32 0.0, %v348
    %v350 = vpop.f32.mrf.mxu0
    %351 = vdwg.mxu0
    %352 = vrot.lane.b32.xlu0 %v151, 112
    %v353 = vpop.permute.xlu0 %352
    %354 = vrot.lane.b32.xlu0 %v160, 112
    %v355 = vpop.permute.xlu0 %354
    %356 = vrot.lane.b32.xlu0 %v151, 88
    %v357 = vpop.permute.xlu0 %356
    %v358 = vsel %vm163, %v353, 0
    %v360 = vsel %vm163, %v355, 0
    %v362 = vsel %vm163, %v357, 0
    %364 = vmatprep.subr.mxu0 0.0
    %365 = vmatpush1.xpose.msra.mxu0 0.0
    %366 = vmatprep.subr.mxu0 0.0
    %367 = vmatpush1.xpose.msra.mxu0 0.0
    %368 = vmatprep.subr.mxu0 0.0
    %369 = vmatpush1.xpose.msra.mxu0 0.0
    %370 = vmatprep.subr.mxu0 0.0
    %371 = vmatpush1.xpose.msra.mxu0 0.0
    %372 = vmatprep.subr.mxu0 0.0
    %373 = vmatpush1.xpose.msra.mxu0 0.0
    %374 = vmatprep.subr.mxu0 0.0
    %375 = vmatpush1.xpose.msra.mxu0 0.0
    %376 = vmatprep.subr.mxu0 0.0
    %377 = vmatpush1.xpose.msra.mxu0 0.0
    %378 = vmatprep.subr.mxu0 0.0
    %379 = vmatpush1.xpose.msra.mxu0 0.0
    %380 = vmatprep.subr.mxu0 0.0
    %381 = vmatpush1.xpose.msra.mxu0 0.0
    %382 = vmatprep.subr.mxu0 0.0
    %383 = vmatpush1.xpose.msra.mxu0 0.0
    %384 = vmatprep.subr.mxu0 0.0
    %385 = vmatpush1.xpose.msra.mxu0 0.0
    %386 = vmatprep.subr.mxu0 0.0
    %387 = vmatpush1.xpose.msra.mxu0 0.0
    %388 = vmatprep.subr.mxu0 0.0
    %389 = vmatpush1.xpose.msra.mxu0 0.0
    %390 = vmatprep.subr.mxu0 0.0
    %391 = vmatpush1.xpose.msra.mxu0 0.0
    %392 = vmatprep.subr.mxu0 0.0
    %393 = vmatpush1.xpose.msra.mxu0 0.0
    %394 = vmatprep.subr.mxu0 0.0
    %395 = vmatpush1.xpose.msra.mxu0 %v362
    %396 = vmatprep.subr.mxu0 0.0
    %397 = vmatpush2.xpose.msra.mxu0 0.0
    %398 = vmatprep.subr.mxu0 0.0
    %399 = vmatpush2.xpose.msra.mxu0 0.0
    %400 = vmatprep.subr.mxu0 0.0
    %401 = vmatpush2.xpose.msra.mxu0 0.0
    %402 = vmatprep.subr.mxu0 0.0
    %403 = vmatpush2.xpose.msra.mxu0 0.0
    %404 = vmatprep.subr.mxu0 0.0
    %405 = vmatpush2.xpose.msra.mxu0 0.0
    %406 = vmatprep.subr.mxu0 0.0
    %407 = vmatpush2.xpose.msra.mxu0 0.0
    %408 = vmatprep.subr.mxu0 0.0
    %409 = vmatpush2.xpose.msra.mxu0 0.0
    %410 = vmatprep.subr.mxu0 0.0
    %411 = vmatpush2.xpose.msra.mxu0 0.0
    %412 = vmatprep.subr.mxu0 0.0
    %413 = vmatpush2.xpose.msra.mxu0 0.0
    %414 = vmatprep.subr.mxu0 0.0
    %415 = vmatpush2.xpose.msra.mxu0 0.0
    %416 = vmatprep.subr.mxu0 0.0
    %417 = vmatpush2.xpose.msra.mxu0 0.0
    %418 = vmatprep.subr.mxu0 0.0
    %419 = vmatpush2.xpose.msra.mxu0 0.0
    %420 = vmatprep.subr.mxu0 0.0
    %421 = vmatpush2.xpose.msra.mxu0 0.0
    %422 = vmatprep.subr.mxu0 0.0
    %423 = vmatpush2.xpose.msra.mxu0 0.0
    %424 = vmatprep.subr.mxu0 0.0
    %425 = vmatpush2.xpose.msra.mxu0 0.0
    %426 = vmatprep.subr.mxu0 0.0
    %427 = vmatpush2.xpose.msra.mxu0 0.0
    %428 = vmatprep.mubr.f32.mxu0 0.0
    %429 = vmatmul.mubr.f32.gmra.mxu0 %v358
    %v430 = vpop.f32.mrf.mxu0
    %v431 = vadd.f32 %v157, %v430
    %v432 = vpop.f32.mrf.mxu0
    %433 = vmatprep.mubr.f32.mxu0 0.0
    %434 = vmatmul.mubr.f32.gmra.mxu0 %v360
    %v435 = vpop.f32.mrf.mxu0
    %v436 = vadd.f32 %v157, %v435
    %v437 = vpop.f32.mrf.mxu0
    %438 = vdwg.mxu0
    %v439 = vsel %vm163, %v431, -inf
    %440 = vmax.xlane.f32.xlu0 %v439
    %v441 = vpop.xlane.xlu0 %440
    %v442 = vsel %vm163, %v436, -inf
    %443 = vmax.xlane.f32.xlu0 %v442
    %v444 = vpop.xlane.xlu0 %443
    %v445 = vsub.f32 %v431, %v441
    %v446 = vsub.f32 %v436, %v444
    %v447 = vmul.f32 %v445, 1.442695
    %v448 = vpow.pop %v447
    %v449 = vmul.f32 %v446, 1.442695
    %v450 = vpow.pop %v449
    %v451 = vsel %vm163, %v448, 0.0
    %452 = vadd.xlane.f32.xlu0 %v451
    %v453 = vpop.xlane.xlu0 %452
    %v454 = vsel %vm163, %v450, 0.0
    %455 = vadd.xlane.f32.xlu0 %v454
    %v456 = vpop.xlane.xlu0 %455
    %v457 = vrcp.pop %v453
    %v458 = vrcp.pop %v456
    %v459 = vmul.f32 %v448, %v457
    %v460 = vmul.f32 %v450, %v458
    %461 = vrot.lane.b32.xlu0 %v136, 72
    %v462 = vpop.permute.xlu0 %461
    %v465 = vsel %vm163, %v459, 0
    %v468 = vsel %vm163, %v460, 0
    %470 = vmatprep.subr.mxu0 0.0
    %471 = vmatpush1.msra.mxu0 0.0
    %472 = vmatprep.subr.mxu0 0.0
    %473 = vmatpush1.msra.mxu0 0.0
    %474 = vmatprep.subr.mxu0 0.0
    %475 = vmatpush1.msra.mxu0 0.0
    %476 = vmatprep.subr.mxu0 0.0
    %477 = vmatpush1.msra.mxu0 0.0
    %478 = vmatprep.subr.mxu0 0.0
    %479 = vmatpush1.msra.mxu0 0.0
    %480 = vmatprep.subr.mxu0 0.0
    %481 = vmatpush1.msra.mxu0 0.0
    %482 = vmatprep.subr.mxu0 0.0
    %483 = vmatpush1.msra.mxu0 0.0
    %484 = vmatprep.subr.mxu0 0.0
    %485 = vmatpush1.msra.mxu0 0.0
    %486 = vmatprep.subr.mxu0 0.0
    %487 = vmatpush1.msra.mxu0 0.0
    %488 = vmatprep.subr.mxu0 0.0
    %489 = vmatpush1.msra.mxu0 0.0
    %490 = vmatprep.subr.mxu0 0.0
    %491 = vmatpush1.msra.mxu0 0.0
    %492 = vmatprep.subr.mxu0 0.0
    %493 = vmatpush1.msra.mxu0 0.0
    %494 = vmatprep.subr.mxu0 0.0
    %495 = vmatpush1.msra.mxu0 0.0
    %496 = vmatprep.subr.mxu0 0.0
    %497 = vmatpush1.msra.mxu0 0.0
    %498 = vmatprep.subr.mxu0 0.0
    %499 = vmatpush1.msra.mxu0 0.0
    %500 = vmatprep.subr.mxu0 0.0
    %501 = vmatpush1.msra.mxu0 %v462
    %502 = vmatprep.subr.mxu0 0.0
    %503 = vmatpush2.msra.mxu0 0.0
    %504 = vmatprep.subr.mxu0 0.0
    %505 = vmatpush2.msra.mxu0 0.0
    %506 = vmatprep.subr.mxu0 0.0
    %507 = vmatpush2.msra.mxu0 0.0
    %508 = vmatprep.subr.mxu0 0.0
    %509 = vmatpush2.msra.mxu0 0.0
    %510 = vmatprep.subr.mxu0 0.0
    %511 = vmatpush2.msra.mxu0 0.0
    %512 = vmatprep.subr.mxu0 0.0
    %513 = vmatpush2.msra.mxu0 0.0
    %514 = vmatprep.subr.mxu0 0.0
    %515 = vmatpush2.msra.mxu0 0.0
    %516 = vmatprep.subr.mxu0 0.0
    %517 = vmatpush2.msra.mxu0 0.0
    %518 = vmatprep.subr.mxu0 0.0
    %519 = vmatpush2.msra.mxu0 0.0
    %520 = vmatprep.subr.mxu0 0.0
    %521 = vmatpush2.msra.mxu0 0.0
    %522 = vmatprep.subr.mxu0 0.0
    %523 = vmatpush2.msra.mxu0 0.0
    %524 = vmatprep.subr.mxu0 0.0
    %525 = vmatpush2.msra.mxu0 0.0
    %526 = vmatprep.subr.mxu0 0.0
    %527 = vmatpush2.msra.mxu0 0.0
    %528 = vmatprep.subr.mxu0 0.0
    %529 = vmatpush2.msra.mxu0 0.0
    %530 = vmatprep.subr.mxu0 0.0
    %531 = vmatpush2.msra.mxu0 0.0
    %532 = vmatprep.subr.mxu0 0.0
    %533 = vmatpush2.msra.mxu0 0.0
    %534 = vmatprep.mubr.f32.mxu0 0.0
    %535 = vmatmul.mubr.f32.gmra.mxu0 %v465
    %v536 = vpop.f32.mrf.mxu0
    %v537 = vadd.f32 0.0, %v536
    %v538 = vpop.f32.mrf.mxu0
    %539 = vmatprep.mubr.f32.mxu0 0.0
    %540 = vmatmul.mubr.f32.gmra.mxu0 %v468
    %v541 = vpop.f32.mrf.mxu0
    %v542 = vadd.f32 0.0, %v541
    %v543 = vpop.f32.mrf.mxu0
    %544 = vdwg.mxu0
    %546 = vrot.lane.b32.xlu0 %v349, 8
    %v547 = vpop.permute.xlu0 %546
    %550 = vrot.lane.b32.xlu0 %v537, 16
    %v551 = vpop.permute.xlu0 %550
    %554 = vrot.lane.b32.xlu0 %v542, 24
    %v555 = vpop.permute.xlu0 %554
    %v557 = vsel %vm163, %v344, %v547
    %vm558 = vcmask 130048
    %v559 = vsel %vm558, %v557, %v551
    %vm560 = vcmask 195584
    %v561 = vsel %vm560, %v559, %v555
    %v562 = vld [vmem:[%s6] sm:$0xff]
    %v563 = vld [vmem:[%s6 + $0x8] sm:$0xff]
    %v564 = vld [vmem:[%s6 + $0x10] sm:$0xff]
    %v565 = vld [vmem:[%s6 + $0x18] sm:$0xff]
    %v567 = vsel %vm38, %v561, 0
    %569 = vmatprep.subr.mxu0 0.0
    %570 = vmatpush1.msra.mxu0 0.0
    %571 = vmatprep.subr.mxu0 0.0
    %572 = vmatpush1.msra.mxu0 0.0
    %573 = vmatprep.subr.mxu0 0.0
    %574 = vmatpush1.msra.mxu0 0.0
    %575 = vmatprep.subr.mxu0 0.0
    %576 = vmatpush1.msra.mxu0 0.0
    %577 = vmatprep.subr.mxu0 0.0
    %578 = vmatpush1.msra.mxu0 0.0
    %579 = vmatprep.subr.mxu0 0.0
    %580 = vmatpush1.msra.mxu0 0.0
    %581 = vmatprep.subr.mxu0 0.0
    %582 = vmatpush1.msra.mxu0 0.0
    %583 = vmatprep.subr.mxu0 0.0
    %584 = vmatpush1.msra.mxu0 0.0
    %585 = vmatprep.subr.mxu0 0.0
    %586 = vmatpush1.msra.mxu0 0.0
    %587 = vmatprep.subr.mxu0 0.0
    %588 = vmatpush1.msra.mxu0 0.0
    %589 = vmatprep.subr.mxu0 0.0
    %590 = vmatpush1.msra.mxu0 0.0
    %591 = vmatprep.subr.mxu0 0.0
    %592 = vmatpush1.msra.mxu0 0.0
    %593 = vmatprep.subr.mxu0 0.0
    %594 = vmatpush1.msra.mxu0 %v565
    %595 = vmatprep.subr.mxu0 0.0
    %596 = vmatpush1.msra.mxu0 %v564
    %597 = vmatprep.subr.mxu0 0.0
    %598 = vmatpush1.msra.mxu0 %v563
    %599 = vmatprep.subr.mxu0 0.0
    %600 = vmatpush1.msra.mxu0 %v562
    %601 = vmatprep.subr.mxu0 0.0
    %602 = vmatpush2.msra.mxu0 0.0
    %603 = vmatprep.subr.mxu0 0.0
    %604 = vmatpush2.msra.mxu0 0.0
    %605 = vmatprep.subr.mxu0 0.0
    %606 = vmatpush2.msra.mxu0 0.0
    %607 = vmatprep.subr.mxu0 0.0
    %608 = vmatpush2.msra.mxu0 0.0
    %609 = vmatprep.subr.mxu0 0.0
    %610 = vmatpush2.msra.mxu0 0.0
    %611 = vmatprep.subr.mxu0 0.0
    %612 = vmatpush2.msra.mxu0 0.0
    %613 = vmatprep.subr.mxu0 0.0
    %614 = vmatpush2.msra.mxu0 0.0
    %615 = vmatprep.subr.mxu0 0.0
    %616 = vmatpush2.msra.mxu0 0.0
    %617 = vmatprep.subr.mxu0 0.0
    %618 = vmatpush2.msra.mxu0 0.0
    %619 = vmatprep.subr.mxu0 0.0
    %620 = vmatpush2.msra.mxu0 0.0
    %621 = vmatprep.subr.mxu0 0.0
    %622 = vmatpush2.msra.mxu0 0.0
    %623 = vmatprep.subr.mxu0 0.0
    %624 = vmatpush2.msra.mxu0 0.0
    %625 = vmatprep.subr.mxu0 0.0
    %626 = vmatpush2.msra.mxu0 0.0
    %627 = vmatprep.subr.mxu0 0.0
    %628 = vmatpush2.msra.mxu0 0.0
    %629 = vmatprep.subr.mxu0 0.0
    %630 = vmatpush2.msra.mxu0 0.0
    %631 = vmatprep.subr.mxu0 0.0
    %632 = vmatpush2.msra.mxu0 0.0
    %633 = vmatprep.mubr.f32.mxu0 0.0
    %634 = vmatmul.mubr.f32.gmra.mxu0 %v567
    %v635 = vpop.f32.mrf.mxu0
    %v636 = vadd.f32 %v36, %v635
    %v637 = vpop.f32.mrf.mxu0
    %638 = vdwg.mxu0
    %v639 = vmul.f32 %v636, %v636
    %v640 = vsel %vm38, %v639, 0.0
    %641 = vadd.xlane.f32.xlu0 %v640
    %v642 = vpop.xlane.xlu0 %641
    %v643 = vmul.f32 %v642, %v42
    %v644 = vadd.f32 %v643, 1e-05
    %v645 = vrsqrt.pop %v644
    %v646 = vmul.f32 %v636, %v645
    %v647 = vld [vmem:[%s7] sm:$0x1]
    %v649 = vlaneseq
    %v650 = vshrl.u32 %v649, 7
    %v651 = vsub.s32 0, %v650
    %v652 = vrot.slane %v647, %v651
    %v654 = vmul.f32 %v646, %v652
    %v655 = vld [vmem:[%s8] sm:$0xff]
    %v656 = vld [vmem:[%s8 + $0x8] sm:$0xff]
    %v657 = vld [vmem:[%s8 + $0x10] sm:$0xff]
    %v658 = vld [vmem:[%s8 + $0x18] sm:$0xff]
    %v660 = vsel %vm38, %v654, 0
    %662 = vmatprep.subr.mxu0 0.0
    %663 = vmatpush1.msra.mxu0 0.0
    %664 = vmatprep.subr.mxu0 0.0
    %665 = vmatpush1.msra.mxu0 0.0
    %666 = vmatprep.subr.mxu0 0.0
    %667 = vmatpush1.msra.mxu0 0.0
    %668 = vmatprep.subr.mxu0 0.0
    %669 = vmatpush1.msra.mxu0 0.0
    %670 = vmatprep.subr.mxu0 0.0
    %671 = vmatpush1.msra.mxu0 0.0
    %672 = vmatprep.subr.mxu0 0.0
    %673 = vmatpush1.msra.mxu0 0.0
    %674 = vmatprep.subr.mxu0 0.0
    %675 = vmatpush1.msra.mxu0 0.0
    %676 = vmatprep.subr.mxu0 0.0
    %677 = vmatpush1.msra.mxu0 0.0
    %678 = vmatprep.subr.mxu0 0.0
    %679 = vmatpush1.msra.mxu0 0.0
    %680 = vmatprep.subr.mxu0 0.0
    %681 = vmatpush1.msra.mxu0 0.0
    %682 = vmatprep.subr.mxu0 0.0
    %683 = vmatpush1.msra.mxu0 0.0
    %684 = vmatprep.subr.mxu0 0.0
    %685 = vmatpush1.msra.mxu0 0.0
    %686 = vmatprep.subr.mxu0 0.0
    %687 = vmatpush1.msra.mxu0 %v658
    %688 = vmatprep.subr.mxu0 0.0
    %689 = vmatpush1.msra.mxu0 %v657
    %690 = vmatprep.subr.mxu0 0.0
    %691 = vmatpush1.msra.mxu0 %v656
    %692 = vmatprep.subr.mxu0 0.0
    %693 = vmatpush1.msra.mxu0 %v655
    %694 = vmatprep.subr.mxu0 0.0
    %695 = vmatpush2.msra.mxu0 0.0
    %696 = vmatprep.subr.mxu0 0.0
    %697 = vmatpush2.msra.mxu0 0.0
    %698 = vmatprep.subr.mxu0 0.0
    %699 = vmatpush2.msra.mxu0 0.0
    %700 = vmatprep.subr.mxu0 0.0
    %701 = vmatpush2.msra.mxu0 0.0
    %702 = vmatprep.subr.mxu0 0.0
    %703 = vmatpush2.msra.mxu0 0.0
    %704 = vmatprep.subr.mxu0 0.0
    %705 = vmatpush2.msra.mxu0 0.0
    %706 = vmatprep.subr.mxu0 0.0
    %707 = vmatpush2.msra.mxu0 0.0
    %708 = vmatprep.subr.mxu0 0.0
    %709 = vmatpush2.msra.mxu0 0.0
    %710 = vmatprep.subr.mxu0 0.0
    %711 = vmatpush2.msra.mxu0 0.0
    %712 = vmatprep.subr.mxu0 0.0
    %713 = vmatpush2.msra.mxu0 0.0
    %714 = vmatprep.subr.mxu0 0.0
    %715 = vmatpush2.msra.mxu0 0.0
    %716 = vmatprep.subr.mxu0 0.0
    %717 = vmatpush2.msra.mxu0 0.0
    %718 = vmatprep.subr.mxu0 0.0
    %719 = vmatpush2.msra.mxu0 0.0
    %720 = vmatprep.subr.mxu0 0.0
    %721 = vmatpush2.msra.mxu0 0.0
    %722 = vmatprep.subr.mxu0 0.0
    %723 = vmatpush2.msra.mxu0 0.0
    %724 = vmatprep.subr.mxu0 0.0
    %725 = vmatpush2.msra.mxu0 0.0
    %726 = vmatprep.mubr.f32.mxu0 0.0
    %727 = vmatmul.mubr.f32.gmra.mxu0 %v660
    %v728 = vpop.f32.mrf.mxu0
    %v729 = vadd.f32 0.0, %v728
    %v730 = vpop.f32.mrf.mxu0
    %731 = vdwg.mxu0
    %v732 = vxor.u32 %v729, 2147483648
    %v733 = vmul.f32 %v732, 1.442695
    %v734 = vpow.pop %v733
    %v735 = vadd.f32 %v734, 1.0
    %v736 = vrcp.pop %v735
    %v737 = vmul.f32 1.0, %v736
    %v738 = vmul.f32 %v729, %v737
    %740 = vrot.lane.b32.xlu0 %v729, 64
    %v741 = vpop.permute.xlu0 %740
    %v743 = vmul.f32 %v738, %v741
    %v744 = vld [vmem:[%s9] sm:$0xff]
    %v745 = vld [vmem:[%s9 + $0x8] sm:$0xff]
    %v746 = vld [vmem:[%s9 + $0x10] sm:$0xff]
    %v747 = vld [vmem:[%s9 + $0x18] sm:$0xff]
    %v748 = vld [vmem:[%s9 + $0x20] sm:$0xff]
    %v749 = vld [vmem:[%s9 + $0x28] sm:$0xff]
    %v750 = vld [vmem:[%s9 + $0x30] sm:$0xff]
    %v751 = vld [vmem:[%s9 + $0x38] sm:$0xff]
    %vm752 = vcmask 523264
    %v754 = vsel %vm752, %v743, 0
    %756 = vmatprep.subr.mxu0 0.0
    %757 = vmatpush1.msra.mxu0 0.0
    %758 = vmatprep.subr.mxu0 0.0
    %759 = vmatpush1.msra.mxu0 0.0
    %760 = vmatprep.subr.mxu0 0.0
    %761 = vmatpush1.msra.mxu0 0.0
    %762 = vmatprep.subr.mxu0 0.0
    %763 = vmatpush1.msra.mxu0 0.0
    %764 = vmatprep.subr.mxu0 0.0
    %765 = vmatpush1.msra.mxu0 0.0
    %766 = vmatprep.subr.mxu0 0.0
    %767 = vmatpush1.msra.mxu0 0.0
    %768 = vmatprep.subr.mxu0 0.0
    %769 = vmatpush1.msra.mxu0 0.0
    %770 = vmatprep.subr.mxu0 0.0
    %771 = vmatpush1.msra.mxu0 0.0
    %772 = vmatprep.subr.mxu0 0.0
    %773 = vmatpush1.msra.mxu0 %v751
    %774 = vmatprep.subr.mxu0 0.0
    %775 = vmatpush1.msra.mxu0 %v750
    %776 = vmatprep.subr.mxu0 0.0
    %777 = vmatpush1.msra.mxu0 %v749
    %778 = vmatprep.subr.mxu0 0.0
    %779 = vmatpush1.msra.mxu0 %v748
    %780 = vmatprep.subr.mxu0 0.0
    %781 = vmatpush1.msra.mxu0 %v747
    %782 = vmatprep.subr.mxu0 0.0
    %783 = vmatpush1.msra.mxu0 %v746
    %784 = vmatprep.subr.mxu0 0.0
    %785 = vmatpush1.msra.mxu0 %v745
    %786 = vmatprep.subr.mxu0 0.0
    %787 = vmatpush1.msra.mxu0 %v744
    %788 = vmatprep.subr.mxu0 0.0
    %789 = vmatpush2.msra.mxu0 0.0
    %790 = vmatprep.subr.mxu0 0.0
    %791 = vmatpush2.msra.mxu0 0.0
    %792 = vmatprep.subr.mxu0 0.0
    %793 = vmatpush2.msra.mxu0 0.0
    %794 = vmatprep.subr.mxu0 0.0
    %795 = vmatpush2.msra.mxu0 0.0
    %796 = vmatprep.subr.mxu0 0.0
    %797 = vmatpush2.msra.mxu0 0.0
    %798 = vmatprep.subr.mxu0 0.0
    %799 = vmatpush2.msra.mxu0 0.0
    %800 = vmatprep.subr.mxu0 0.0
    %801 = vmatpush2.msra.mxu0 0.0
    %802 = vmatprep.subr.mxu0 0.0
    %803 = vmatpush2.msra.mxu0 0.0
    %804 = vmatprep.subr.mxu0 0.0
    %805 = vmatpush2.msra.mxu0 0.0
    %806 = vmatprep.subr.mxu0 0.0
    %807 = vmatpush2.msra.mxu0 0.0
    %808 = vmatprep.subr.mxu0 0.0
    %809 = vmatpush2.msra.mxu0 0.0
    %810 = vmatprep.subr.mxu0 0.0
    %811 = vmatpush2.msra.mxu0 0.0
    %812 = vmatprep.subr.mxu0 0.0
    %813 = vmatpush2.msra.mxu0 0.0
    %814 = vmatprep.subr.mxu0 0.0
    %815 = vmatpush2.msra.mxu0 0.0
    %816 = vmatprep.subr.mxu0 0.0
    %817 = vmatpush2.msra.mxu0 0.0
    %818 = vmatprep.subr.mxu0 0.0
    %819 = vmatpush2.msra.mxu0 0.0
    %820 = vmatprep.mubr.f32.mxu0 0.0
    %821 = vmatmul.mubr.f32.gmra.mxu0 %v754
    %v822 = vpop.f32.mrf.mxu0
    %v823 = vadd.f32 %v636, %v822
    %v824 = vpop.f32.mrf.mxu0
    %825 = vdwg.mxu0
    %826 = vst.msk [vmem:[#allocation2] sm:$0xff] %vm38, %v823
    // Predicated region
    $region42: #{glm_block.1} parent=1 // pred_check
      _
    $region43: #{glm_block.1} parent=1 // pred_check_branch
      %828 = sbr.rel (0) target = $region45
    $region44: #{glm_block.1} parent=1 // pred_region
      %s830 = ssub.s32 128, 128
      %831 = vsyncadd [#allocation3], %s830
      %s833 = sshll.u32 [#allocation2], 4
      %s834 = int_to_ptr.vmem [resolvable:$true] %s833
      %836 = dma.vmem_to_hbm [thread:$0]  %s834, 128, %s10, [#allocation3]
    $region45: #{glm_block.1} parent=1 // pred_fallthru
      _
    // Predicated region
    $region46: #{glm_block.1} parent=1 // pred_check
      _
    $region47: #{glm_block.1} parent=1 // pred_check_branch
      %838 = sbr.rel (0) target = $region49
    $region48: #{glm_block.1} parent=1 // pred_region
      %839 = dma.done [#allocation3], 128
    $region49: #{glm_block.1} parent=1 // pred_fallthru
      _
    %840 = vsyncpa [#allocation3], 1

</llo_original>
